<compile_context>
chip_gen: v6e
topology: v6e:2x2x1
jax: 0.10.0
libtpu: 0.0.40
codegen_flags: <defaults>
</compile_context>

<pallas_src>
import jax
import jax.numpy as jnp
from jax.experimental import pallas as pl
from jax.experimental.pallas import tpu as pltpu

# Model hyper-parameters (small, but consistent with the module's semantics).
N_VOCAB = 50
HIDDEN = 32                      # hidden_size -> conv length axis and C_out
MAX_LEN = 16                     # max_len     -> conv C_in
KERNEL = 3                       # kernel_size
BS = 2
L_VALID = HIDDEN - KERNEL + 1    # 30, conv output length
POOL_OUT = 10                    # AdaptiveAvgPool1d(10); 30 % 10 == 0
D_IN = MAX_LEN * HIDDEN          # 512 = 4 x 128 lanes (dense K dim for the MXU)
D_OUT = HIDDEN * POOL_OUT        # 320 (lane-dense output width)
SUBLANE = 8                      # pad batch rows to this multiple


def imdb_cnn_kernel(x_ref, w_ref, b_ref, o_ref):
    """Fused conv+pool (one matmul) + log-softmax for the whole (padded) batch.

    x_ref: (bs_pad, D_IN)    float32  flattened embedding output (lane-dense)
    w_ref: (D_IN,  D_OUT)    float32  effective conv+pool weight matrix
    b_ref: (1,     D_OUT)    float32  flattened bias row (conv bias per pool pos)
    o_ref: (bs_pad, D_OUT)   float32  log-softmax over the (C_out * 10) row
    """
    y = jnp.dot(x_ref[...], w_ref[...], preferred_element_type=jnp.float32)
    y = y + b_ref[...]                               # broadcast (1, D_OUT)

    # LogSoftmax over the flattened feature row (per batch element).
    m = jnp.max(y, axis=-1, keepdims=True)
    z = y - m
    lse = jnp.log(jnp.sum(jnp.exp(z), axis=-1, keepdims=True))
    o_ref[...] = (z - lse).astype(o_ref.dtype)


def imdb_cnn_forward(inp_tokens, emb_table, conv_w, conv_b):
    """inp_tokens: (bs, max_len) int32; returns (bs, hidden*10) float32 log-probs."""
    bs = inp_tokens.shape[0]
    bs_pad = int(pl.cdiv(bs, SUBLANE)) * SUBLANE

    # Glue: embedding gather in plain JAX (not the hot path).
    e_out = emb_table[inp_tokens].astype(jnp.float32)        # (bs, C_in, L)
    x_flat = e_out.reshape(bs, D_IN)                         # (bs, 512) lane-dense
    x_pad = jnp.zeros((bs_pad, D_IN), jnp.float32).at[:bs].set(x_flat)

    # Adaptive-avg-pool matrix: P[l, p] = 1/win for l in [win*p, win*(p+1)).
    # Valid bias-after-pool fusion requires rows summing to exactly 1.
    assert L_VALID % POOL_OUT == 0, "pool fusion assumes L_VALID % POOL_OUT == 0"
    win = L_VALID // POOL_OUT
    l_idx = jnp.arange(L_VALID)[:, None]
    p_idx = jnp.arange(POOL_OUT)[None, :]
    pool_mat = jnp.where((l_idx >= win * p_idx) & (l_idx < win * (p_idx + 1)),
                         1.0 / win, 0.0).astype(jnp.float32)  # (L_VALID, POOL_OUT)

    # Shift tensor S[k, j, l] = [j == l + k]: expresses the conv as a linear map
    # from the flattened (C_in, L) input to the (C_out, L_VALID) output.
    j_idx = jnp.arange(HIDDEN)[:, None]
    lv_idx = jnp.arange(L_VALID)[None, :]
    shift = jnp.stack([(j_idx == (lv_idx + k)).astype(jnp.float32)
                       for k in range(KERNEL)], axis=0)       # (K, L, L_VALID)

    # W_eff[c*L + j, o*10 + p] = sum_{k,l} conv_w[o,c,k] * [j == l+k] * pool_mat[l,p]
    w_eff = jnp.einsum('ock,kjl,lp->cjop',
                       conv_w.astype(jnp.float32), shift, pool_mat)
    w_eff = w_eff.reshape(D_IN, D_OUT)                        # (512, 320)

    # Conv bias after a mean pool (rows sum to 1): repeat per pooled position.
    b_flat = jnp.repeat(conv_b.astype(jnp.float32), POOL_OUT).reshape(1, D_OUT)

    cost = pl.CostEstimate(
        flops=2 * bs_pad * D_IN * D_OUT,
        transcendentals=bs_pad * D_OUT,
        bytes_accessed=4 * (bs_pad * D_IN + D_IN * D_OUT + D_OUT + bs_pad * D_OUT),
    )

    out = pl.pallas_call(
        imdb_cnn_kernel,
        out_shape=jax.ShapeDtypeStruct((bs_pad, D_OUT), jnp.float32),
        grid=(1,),                                   # single step: no per-batch grid overhead
        in_specs=[
            pl.BlockSpec((bs_pad, D_IN), lambda i: (0, 0)),
            pl.BlockSpec((D_IN, D_OUT), lambda i: (0, 0)),
            pl.BlockSpec((1, D_OUT), lambda i: (0, 0)),
        ],
        out_specs=pl.BlockSpec((bs_pad, D_OUT), lambda i: (0, 0)),
        compiler_params=pltpu.CompilerParams(
            dimension_semantics=("arbitrary",)),
        cost_estimate=cost,
    )(x_pad, w_eff, b_flat)

    return out[:bs]                                   # (bs, HIDDEN * POOL_OUT)


def reference_forward(inp_tokens, emb_table, conv_w, conv_b):
    """Pure-JAX reference mirroring the PyTorch forward."""
    bs = inp_tokens.shape[0]
    e_out = emb_table[inp_tokens].astype(jnp.float32)               # (bs, C_in, L)
    xs = jnp.stack([e_out[:, :, k:k + L_VALID] for k in range(KERNEL)], axis=-1)
    conv = jnp.einsum('bclk,ock->bol', xs, conv_w) + conv_b[None, :, None]
    pooled = conv.reshape(bs, HIDDEN, POOL_OUT, L_VALID // POOL_OUT).mean(-1)
    flat = pooled.reshape(bs, -1)
    return jax.nn.log_softmax(flat, axis=-1)


if __name__ == "__main__":
    key = jax.random.PRNGKey(0)
    k_tok, k_emb, k_w, k_b = jax.random.split(key, 4)

    inp = jax.random.randint(k_tok, (BS, MAX_LEN), 0, N_VOCAB, dtype=jnp.int32)
    emb_table = jax.random.normal(k_emb, (N_VOCAB, HIDDEN), dtype=jnp.float32)
    fan_in = MAX_LEN * KERNEL
    bound = 1.0 / (fan_in ** 0.5)
    conv_w = jax.random.uniform(k_w, (HIDDEN, MAX_LEN, KERNEL),
                                minval=-bound, maxval=bound, dtype=jnp.float32)
    conv_b = jax.random.uniform(k_b, (HIDDEN,),
                                minval=-bound, maxval=bound, dtype=jnp.float32)

    out = imdb_cnn_forward(inp, emb_table, conv_w, conv_b)
    out = jax.block_until_ready(out)

    ref = reference_forward(inp, emb_table, conv_w, conv_b)
    assert out.shape == (BS, HIDDEN * POOL_OUT)
    assert jnp.allclose(out, ref, atol=1e-4, rtol=1e-4), "mismatch vs reference"

    print("KERNEL_OK")
</pallas_src>

<mosaic_0001>
module attributes {stable_mosaic.version = 11 : i64} {
  func.func @imdb_cnn_kernel(%arg0: i32, %arg1: memref<8x512xf32, #tpu.memory_space<vmem>>, %arg2: memref<512x320xf32, #tpu.memory_space<vmem>>, %arg3: memref<1x320xf32, #tpu.memory_space<vmem>>, %arg4: memref<8x320xf32, #tpu.memory_space<vmem>>) attributes {dimension_semantics = [#tpu.dimension_semantics<arbitrary>], iteration_bounds = array<i64: 1>, scalar_prefetch = 0 : i64, scratch_operands = 0 : i64, tpu.core_type = #tpu.core_type<tc>, window_params = [{pipeline_mode = #tpu.pipeline_mode<synchronous>, transform_indices = @transform_0, window_bounds = array<i64: 8, 512>}, {pipeline_mode = #tpu.pipeline_mode<synchronous>, transform_indices = @transform_1, window_bounds = array<i64: 512, 320>}, {pipeline_mode = #tpu.pipeline_mode<synchronous>, transform_indices = @transform_2, window_bounds = array<i64: 1, 320>}, {pipeline_mode = #tpu.pipeline_mode<synchronous>, transform_indices = @transform_3, window_bounds = array<i64: 8, 320>}]} {
    %c0 = arith.constant 0 : index
    %c0_0 = arith.constant 0 : index
    %0 = vector.load %arg1[%c0, %c0_0] : memref<8x512xf32, #tpu.memory_space<vmem>>, vector<8x512xf32>
    %c0_1 = arith.constant 0 : index
    %c0_2 = arith.constant 0 : index
    %1 = vector.load %arg2[%c0_1, %c0_2] : memref<512x320xf32, #tpu.memory_space<vmem>>, vector<512x320xf32>
    %cst = arith.constant dense<0.000000e+00> : vector<8x320xf32>
    %2 = tpu.matmul %0, %1, %cst {dimension_numbers = #tpu.dot_dimension_numbers<[1], [0], [0], [1], [0, 0, 1, 1], [], []>} : vector<8x512xf32>, vector<512x320xf32>, vector<8x320xf32> -> vector<8x320xf32>
    %c0_3 = arith.constant 0 : index
    %c0_4 = arith.constant 0 : index
    %3 = vector.load %arg3[%c0_3, %c0_4] : memref<1x320xf32, #tpu.memory_space<vmem>>, vector<1x320xf32>
    %4 = vector.broadcast %3 : vector<1x320xf32> to vector<8x320xf32>
    %5 = arith.addf %2, %4 : vector<8x320xf32>
    %cst_5 = arith.constant dense<0xFF800000> : vector<8xf32>
    %6 = vector.multi_reduction <maximumf>, %5, %cst_5 [1] : vector<8x320xf32> to vector<8xf32>
    %7 = vector.shape_cast %6 : vector<8xf32> to vector<8x1xf32>
    %8 = vector.broadcast %7 : vector<8x1xf32> to vector<8x320xf32>
    %9 = arith.subf %5, %8 : vector<8x320xf32>
    %10 = math.exp %9 : vector<8x320xf32>
    %cst_6 = arith.constant dense<0.000000e+00> : vector<8xf32>
    %11 = vector.multi_reduction <add>, %10, %cst_6 [1] : vector<8x320xf32> to vector<8xf32>
    %12 = vector.shape_cast %11 : vector<8xf32> to vector<8x1xf32>
    %13 = math.log %12 : vector<8x1xf32>
    %14 = vector.broadcast %13 : vector<8x1xf32> to vector<8x320xf32>
    %15 = arith.subf %9, %14 : vector<8x320xf32>
    %c0_7 = arith.constant 0 : index
    %c0_8 = arith.constant 0 : index
    %16 = vector.load %arg4[%c0_7, %c0_8] : memref<8x320xf32, #tpu.memory_space<vmem>>, vector<8x320xf32>
    tpu.vector_store %arg4[%c0_7, %c0_8], %15 {strides = array<i32>} : memref<8x320xf32, #tpu.memory_space<vmem>>, vector<8x320xf32>,
    return
  }
  func.func @transform_0(%arg0: i32) -> (i32, i32) {
    %c0_i32 = arith.constant 0 : i32
    %c0_i32_0 = arith.constant 0 : i32
    %c0_i32_1 = arith.constant 0 : i32
    return %c0_i32, %c0_i32_0 : i32, i32
  }
  func.func @transform_1(%arg0: i32) -> (i32, i32) {
    %c0_i32 = arith.constant 0 : i32
    %c0_i32_0 = arith.constant 0 : i32
    %c0_i32_1 = arith.constant 0 : i32
    return %c0_i32, %c0_i32_0 : i32, i32
  }
  func.func @transform_2(%arg0: i32) -> (i32, i32) {
    %c0_i32 = arith.constant 0 : i32
    %c0_i32_0 = arith.constant 0 : i32
    %c0_i32_1 = arith.constant 0 : i32
    return %c0_i32, %c0_i32_0 : i32, i32
  }
  func.func @transform_3(%arg0: i32) -> (i32, i32) {
    %c0_i32 = arith.constant 0 : i32
    %c0_i32_0 = arith.constant 0 : i32
    %c0_i32_1 = arith.constant 0 : i32
    return %c0_i32, %c0_i32_0 : i32, i32
  }
}

</mosaic_0001>

<llo_original>
// kernel: tpu_custom_call.1
$region0: #{tpu_custom_call.1}
  #allocation0 [shape = 'u32[]', space=smem, size = 0x4, offset = 0x4, fixed_abs, tag = 'smem constant byte address 0x4 - core index']
  #allocation1 [shape = 'u32[144,128]{1,0:T(1,128)}', space=vmem, size = 0x12000, scoped, tag = 'internal scratch']
  %s0 = inlined_call_operand.vmem [shape: f32[8,512], index: 0, kind: input, shape index: {}]
  %s1 = inlined_call_operand.vmem [shape: f32[512,320], index: 1, kind: input, shape index: {}]
  %s2 = inlined_call_operand.vmem [shape: f32[1,320], index: 2, kind: input, shape index: {}]
  %s3 = inlined_call_operand.hbm [shape: f32[8,320], index: 3, kind: output, shape index: {}]
  %s4 = sld [smem:[#allocation0]]
  $region22: #{tpu_custom_call.1} parent=0
    _
  %s6 = ssub.s32 1, %s4
  %s7 = scalar_select 0, %s6, %s4
  $region1: #{tpu_custom_call.1} parent=0
    #allocation2 [shape = 'u8[12288]{0}', space=vmem, size = 0x3000, scoped, tag = 'output window, operand 0, single buffered']
    #allocation3 [shape = 's32[1]{0}', space=sflag, size = 0x4, scoped, tag = 'scoped memory for tpu_custom_call.1']
    %8 = vsyncpa [#allocation3], 0
    // Predicated region
    $region2: #{tpu_custom_call.1} parent=1 // pred_check
      _
    $region3: #{tpu_custom_call.1} parent=1 // pred_check_branch
      %10 = sbr.rel (0) target = $region5
    $region4: #{tpu_custom_call.1} parent=1 // pred_region
      _
    $region5: #{tpu_custom_call.1} parent=1 // pred_fallthru
      _
    // Predicated region
    $region6: #{tpu_custom_call.1} parent=1 // pred_check
      _
    $region7: #{tpu_custom_call.1} parent=1 // pred_check_branch
      %12 = sbr.rel (0) target = $region9
    $region8: #{tpu_custom_call.1} parent=1 // pred_region
      _
    $region9: #{tpu_custom_call.1} parent=1 // pred_fallthru
      _
    // Predicated region
    $region10: #{tpu_custom_call.1} parent=1 // pred_check
      _
    $region11: #{tpu_custom_call.1} parent=1 // pred_check_branch
      %14 = sbr.rel (0) target = $region13
    $region12: #{tpu_custom_call.1} parent=1 // pred_region
      _
    $region13: #{tpu_custom_call.1} parent=1 // pred_fallthru
      _
    %v15 = vld [vmem:[%s0] sm:$0xff]
    %v16 = vld [vmem:[%s0 + $0x8] sm:$0xff]
    %v17 = vld [vmem:[%s0 + $0x10] sm:$0xff]
    %v18 = vld [vmem:[%s0 + $0x18] sm:$0xff]
    %v19 = vld [vmem:[%s1] sm:$0xff]
    %v20 = vld [vmem:[%s1 + $0x8] sm:$0xff]
    %v21 = vld [vmem:[%s1 + $0x10] sm:$0xff]
    %v22 = vld [vmem:[%s1 + $0x18] sm:$0xff]
    %v23 = vld [vmem:[%s1 + $0x20] sm:$0xff]
    %v24 = vld [vmem:[%s1 + $0x28] sm:$0xff]
    %v25 = vld [vmem:[%s1 + $0x30] sm:$0xff]
    %v26 = vld [vmem:[%s1 + $0x38] sm:$0xff]
    %v27 = vld [vmem:[%s1 + $0x40] sm:$0xff]
    %v28 = vld [vmem:[%s1 + $0x48] sm:$0xff]
    %v29 = vld [vmem:[%s1 + $0x50] sm:$0xff]
    %v30 = vld [vmem:[%s1 + $0x58] sm:$0xff]
    %v31 = vld [vmem:[%s1 + $0x60] sm:$0xff]
    %v32 = vld [vmem:[%s1 + $0x68] sm:$0xff]
    %v33 = vld [vmem:[%s1 + $0x70] sm:$0xff]
    %v34 = vld [vmem:[%s1 + $0x78] sm:$0xff]
    %v35 = vld [vmem:[%s1 + $0x80] sm:$0xff]
    %v36 = vld [vmem:[%s1 + $0x88] sm:$0xff]
    %v37 = vld [vmem:[%s1 + $0x90] sm:$0xff]
    %v38 = vld [vmem:[%s1 + $0x98] sm:$0xff]
    %v39 = vld [vmem:[%s1 + $0xa0] sm:$0xff]
    %v40 = vld [vmem:[%s1 + $0xa8] sm:$0xff]
    %v41 = vld [vmem:[%s1 + $0xb0] sm:$0xff]
    %v42 = vld [vmem:[%s1 + $0xb8] sm:$0xff]
    %v43 = vld [vmem:[%s1 + $0xc0] sm:$0xff]
    %v44 = vld [vmem:[%s1 + $0xc8] sm:$0xff]
    %v45 = vld [vmem:[%s1 + $0xd0] sm:$0xff]
    %v46 = vld [vmem:[%s1 + $0xd8] sm:$0xff]
    %v47 = vld [vmem:[%s1 + $0xe0] sm:$0xff]
    %v48 = vld [vmem:[%s1 + $0xe8] sm:$0xff]
    %v49 = vld [vmem:[%s1 + $0xf0] sm:$0xff]
    %v50 = vld [vmem:[%s1 + $0xf8] sm:$0xff]
    %v51 = vld [vmem:[%s1 + $0x100] sm:$0xff]
    %v52 = vld [vmem:[%s1 + $0x108] sm:$0xff]
    %v53 = vld [vmem:[%s1 + $0x110] sm:$0xff]
    %v54 = vld [vmem:[%s1 + $0x118] sm:$0xff]
    %v55 = vld [vmem:[%s1 + $0x120] sm:$0xff]
    %v56 = vld [vmem:[%s1 + $0x128] sm:$0xff]
    %v57 = vld [vmem:[%s1 + $0x130] sm:$0xff]
    %v58 = vld [vmem:[%s1 + $0x138] sm:$0xff]
    %v59 = vld [vmem:[%s1 + $0x140] sm:$0xff]
    %v60 = vld [vmem:[%s1 + $0x148] sm:$0xff]
    %v61 = vld [vmem:[%s1 + $0x150] sm:$0xff]
    %v62 = vld [vmem:[%s1 + $0x158] sm:$0xff]
    %v63 = vld [vmem:[%s1 + $0x160] sm:$0xff]
    %v64 = vld [vmem:[%s1 + $0x168] sm:$0xff]
    %v65 = vld [vmem:[%s1 + $0x170] sm:$0xff]
    %v66 = vld [vmem:[%s1 + $0x178] sm:$0xff]
    %v67 = vld [vmem:[%s1 + $0x180] sm:$0xff]
    %v68 = vld [vmem:[%s1 + $0x188] sm:$0xff]
    %v69 = vld [vmem:[%s1 + $0x190] sm:$0xff]
    %v70 = vld [vmem:[%s1 + $0x198] sm:$0xff]
    %v71 = vld [vmem:[%s1 + $0x1a0] sm:$0xff]
    %v72 = vld [vmem:[%s1 + $0x1a8] sm:$0xff]
    %v73 = vld [vmem:[%s1 + $0x1b0] sm:$0xff]
    %v74 = vld [vmem:[%s1 + $0x1b8] sm:$0xff]
    %v75 = vld [vmem:[%s1 + $0x1c0] sm:$0xff]
    %v76 = vld [vmem:[%s1 + $0x1c8] sm:$0xff]
    %v77 = vld [vmem:[%s1 + $0x1d0] sm:$0xff]
    %v78 = vld [vmem:[%s1 + $0x1d8] sm:$0xff]
    %v79 = vld [vmem:[%s1 + $0x1e0] sm:$0xff]
    %v80 = vld [vmem:[%s1 + $0x1e8] sm:$0xff]
    %v81 = vld [vmem:[%s1 + $0x1f0] sm:$0xff]
    %v82 = vld [vmem:[%s1 + $0x1f8] sm:$0xff]
    %v83 = vld [vmem:[%s1 + $0x200] sm:$0xff]
    %v84 = vld [vmem:[%s1 + $0x208] sm:$0xff]
    %v85 = vld [vmem:[%s1 + $0x210] sm:$0xff]
    %v86 = vld [vmem:[%s1 + $0x218] sm:$0xff]
    %v87 = vld [vmem:[%s1 + $0x220] sm:$0xff]
    %v88 = vld [vmem:[%s1 + $0x228] sm:$0xff]
    %v89 = vld [vmem:[%s1 + $0x230] sm:$0xff]
    %v90 = vld [vmem:[%s1 + $0x238] sm:$0xff]
    %v91 = vld [vmem:[%s1 + $0x240] sm:$0xff]
    %v92 = vld [vmem:[%s1 + $0x248] sm:$0xff]
    %v93 = vld [vmem:[%s1 + $0x250] sm:$0xff]
    %v94 = vld [vmem:[%s1 + $0x258] sm:$0xff]
    %v95 = vld [vmem:[%s1 + $0x260] sm:$0xff]
    %v96 = vld [vmem:[%s1 + $0x268] sm:$0xff]
    %v97 = vld [vmem:[%s1 + $0x270] sm:$0xff]
    %v98 = vld [vmem:[%s1 + $0x278] sm:$0xff]
    %v99 = vld [vmem:[%s1 + $0x280] sm:$0xff]
    %v100 = vld [vmem:[%s1 + $0x288] sm:$0xff]
    %v101 = vld [vmem:[%s1 + $0x290] sm:$0xff]
    %v102 = vld [vmem:[%s1 + $0x298] sm:$0xff]
    %v103 = vld [vmem:[%s1 + $0x2a0] sm:$0xff]
    %v104 = vld [vmem:[%s1 + $0x2a8] sm:$0xff]
    %v105 = vld [vmem:[%s1 + $0x2b0] sm:$0xff]
    %v106 = vld [vmem:[%s1 + $0x2b8] sm:$0xff]
    %v107 = vld [vmem:[%s1 + $0x2c0] sm:$0xff]
    %v108 = vld [vmem:[%s1 + $0x2c8] sm:$0xff]
    %v109 = vld [vmem:[%s1 + $0x2d0] sm:$0xff]
    %v110 = vld [vmem:[%s1 + $0x2d8] sm:$0xff]
    %v111 = vld [vmem:[%s1 + $0x2e0] sm:$0xff]
    %v112 = vld [vmem:[%s1 + $0x2e8] sm:$0xff]
    %v113 = vld [vmem:[%s1 + $0x2f0] sm:$0xff]
    %v114 = vld [vmem:[%s1 + $0x2f8] sm:$0xff]
    %v115 = vld [vmem:[%s1 + $0x300] sm:$0xff]
    %v116 = vld [vmem:[%s1 + $0x308] sm:$0xff]
    %v117 = vld [vmem:[%s1 + $0x310] sm:$0xff]
    %v118 = vld [vmem:[%s1 + $0x318] sm:$0xff]
    %v119 = vld [vmem:[%s1 + $0x320] sm:$0xff]
    %v120 = vld [vmem:[%s1 + $0x328] sm:$0xff]
    %v121 = vld [vmem:[%s1 + $0x330] sm:$0xff]
    %v122 = vld [vmem:[%s1 + $0x338] sm:$0xff]
    %v123 = vld [vmem:[%s1 + $0x340] sm:$0xff]
    %v124 = vld [vmem:[%s1 + $0x348] sm:$0xff]
    %v125 = vld [vmem:[%s1 + $0x350] sm:$0xff]
    %v126 = vld [vmem:[%s1 + $0x358] sm:$0xff]
    %v127 = vld [vmem:[%s1 + $0x360] sm:$0xff]
    %v128 = vld [vmem:[%s1 + $0x368] sm:$0xff]
    %v129 = vld [vmem:[%s1 + $0x370] sm:$0xff]
    %v130 = vld [vmem:[%s1 + $0x378] sm:$0xff]
    %v131 = vld [vmem:[%s1 + $0x380] sm:$0xff]
    %v132 = vld [vmem:[%s1 + $0x388] sm:$0xff]
    %v133 = vld [vmem:[%s1 + $0x390] sm:$0xff]
    %v134 = vld [vmem:[%s1 + $0x398] sm:$0xff]
    %v135 = vld [vmem:[%s1 + $0x3a0] sm:$0xff]
    %v136 = vld [vmem:[%s1 + $0x3a8] sm:$0xff]
    %v137 = vld [vmem:[%s1 + $0x3b0] sm:$0xff]
    %v138 = vld [vmem:[%s1 + $0x3b8] sm:$0xff]
    %v139 = vld [vmem:[%s1 + $0x3c0] sm:$0xff]
    %v140 = vld [vmem:[%s1 + $0x3c8] sm:$0xff]
    %v141 = vld [vmem:[%s1 + $0x3d0] sm:$0xff]
    %v142 = vld [vmem:[%s1 + $0x3d8] sm:$0xff]
    %v143 = vld [vmem:[%s1 + $0x3e0] sm:$0xff]
    %v144 = vld [vmem:[%s1 + $0x3e8] sm:$0xff]
    %v145 = vld [vmem:[%s1 + $0x3f0] sm:$0xff]
    %v146 = vld [vmem:[%s1 + $0x3f8] sm:$0xff]
    %v147 = vld [vmem:[%s1 + $0x400] sm:$0xff]
    %v148 = vld [vmem:[%s1 + $0x408] sm:$0xff]
    %v149 = vld [vmem:[%s1 + $0x410] sm:$0xff]
    %v150 = vld [vmem:[%s1 + $0x418] sm:$0xff]
    %v151 = vld [vmem:[%s1 + $0x420] sm:$0xff]
    %v152 = vld [vmem:[%s1 + $0x428] sm:$0xff]
    %v153 = vld [vmem:[%s1 + $0x430] sm:$0xff]
    %v154 = vld [vmem:[%s1 + $0x438] sm:$0xff]
    %v155 = vld [vmem:[%s1 + $0x440] sm:$0xff]
    %v156 = vld [vmem:[%s1 + $0x448] sm:$0xff]
    %v157 = vld [vmem:[%s1 + $0x450] sm:$0xff]
    %v158 = vld [vmem:[%s1 + $0x458] sm:$0xff]
    %v159 = vld [vmem:[%s1 + $0x460] sm:$0xff]
    %v160 = vld [vmem:[%s1 + $0x468] sm:$0xff]
    %v161 = vld [vmem:[%s1 + $0x470] sm:$0xff]
    %v162 = vld [vmem:[%s1 + $0x478] sm:$0xff]
    %v163 = vld [vmem:[%s1 + $0x480] sm:$0xff]
    %v164 = vld [vmem:[%s1 + $0x488] sm:$0xff]
    %v165 = vld [vmem:[%s1 + $0x490] sm:$0xff]
    %v166 = vld [vmem:[%s1 + $0x498] sm:$0xff]
    %v167 = vld [vmem:[%s1 + $0x4a0] sm:$0xff]
    %v168 = vld [vmem:[%s1 + $0x4a8] sm:$0xff]
    %v169 = vld [vmem:[%s1 + $0x4b0] sm:$0xff]
    %v170 = vld [vmem:[%s1 + $0x4b8] sm:$0xff]
    %v171 = vld [vmem:[%s1 + $0x4c0] sm:$0xff]
    %v172 = vld [vmem:[%s1 + $0x4c8] sm:$0xff]
    %v173 = vld [vmem:[%s1 + $0x4d0] sm:$0xff]
    %v174 = vld [vmem:[%s1 + $0x4d8] sm:$0xff]
    %v175 = vld [vmem:[%s1 + $0x4e0] sm:$0xff]
    %v176 = vld [vmem:[%s1 + $0x4e8] sm:$0xff]
    %v177 = vld [vmem:[%s1 + $0x4f0] sm:$0xff]
    %v178 = vld [vmem:[%s1 + $0x4f8] sm:$0xff]
    %v179 = vld [vmem:[%s1 + $0x500] sm:$0xff]
    %v180 = vld [vmem:[%s1 + $0x508] sm:$0xff]
    %v181 = vld [vmem:[%s1 + $0x510] sm:$0xff]
    %v182 = vld [vmem:[%s1 + $0x518] sm:$0xff]
    %v183 = vld [vmem:[%s1 + $0x520] sm:$0xff]
    %v184 = vld [vmem:[%s1 + $0x528] sm:$0xff]
    %v185 = vld [vmem:[%s1 + $0x530] sm:$0xff]
    %v186 = vld [vmem:[%s1 + $0x538] sm:$0xff]
    %v187 = vld [vmem:[%s1 + $0x540] sm:$0xff]
    %v188 = vld [vmem:[%s1 + $0x548] sm:$0xff]
    %v189 = vld [vmem:[%s1 + $0x550] sm:$0xff]
    %v190 = vld [vmem:[%s1 + $0x558] sm:$0xff]
    %v191 = vld [vmem:[%s1 + $0x560] sm:$0xff]
    %v192 = vld [vmem:[%s1 + $0x568] sm:$0xff]
    %v193 = vld [vmem:[%s1 + $0x570] sm:$0xff]
    %v194 = vld [vmem:[%s1 + $0x578] sm:$0xff]
    %v195 = vld [vmem:[%s1 + $0x580] sm:$0xff]
    %v196 = vld [vmem:[%s1 + $0x588] sm:$0xff]
    %v197 = vld [vmem:[%s1 + $0x590] sm:$0xff]
    %v198 = vld [vmem:[%s1 + $0x598] sm:$0xff]
    %v199 = vld [vmem:[%s1 + $0x5a0] sm:$0xff]
    %v200 = vld [vmem:[%s1 + $0x5a8] sm:$0xff]
    %v201 = vld [vmem:[%s1 + $0x5b0] sm:$0xff]
    %v202 = vld [vmem:[%s1 + $0x5b8] sm:$0xff]
    %v203 = vld [vmem:[%s1 + $0x5c0] sm:$0xff]
    %v204 = vld [vmem:[%s1 + $0x5c8] sm:$0xff]
    %v205 = vld [vmem:[%s1 + $0x5d0] sm:$0xff]
    %v206 = vld [vmem:[%s1 + $0x5d8] sm:$0xff]
    %v207 = vld [vmem:[%s1 + $0x5e0] sm:$0xff]
    %v208 = vld [vmem:[%s1 + $0x5e8] sm:$0xff]
    %v209 = vld [vmem:[%s1 + $0x5f0] sm:$0xff]
    %v210 = vld [vmem:[%s1 + $0x5f8] sm:$0xff]
    %v211 = vld [vmem:[%s2] sm:$0x7]
    %v213 = vlaneseq
    %v214 = vshrl.u32 %v213, 7
    %v215 = vsub.s32 0, %v214
    %v216 = vrot.slane %v211, %v215
    %v217 = vlaneseq
    %v218 = vshrl.u32 %v217, 7
    %v219 = vsub.s32 1, %v218
    %v220 = vrot.slane %v211, %v219
    %v221 = vlaneseq
    %v222 = vshrl.u32 %v221, 7
    %v223 = vsub.s32 2, %v222
    %v224 = vrot.slane %v211, %v223
    %228 = vmatprep.subr.mxu0 %v65
    %229 = vmatpush1.msra.mxu0 %v64
    %230 = vmatprep.subr.mxu0 %v62
    %231 = vmatpush1.msra.mxu0 %v61
    %232 = vmatprep.subr.mxu0 %v59
    %233 = vmatpush1.msra.mxu0 %v58
    %234 = vmatprep.subr.mxu0 %v56
    %235 = vmatpush1.msra.mxu0 %v55
    %236 = vmatprep.subr.mxu0 %v53
    %237 = vmatpush1.msra.mxu0 %v52
    %238 = vmatprep.subr.mxu0 %v50
    %239 = vmatpush1.msra.mxu0 %v49
    %240 = vmatprep.subr.mxu0 %v47
    %241 = vmatpush1.msra.mxu0 %v46
    %242 = vmatprep.subr.mxu0 %v44
    %243 = vmatpush1.msra.mxu0 %v43
    %244 = vmatprep.subr.mxu0 %v41
    %245 = vmatpush1.msra.mxu0 %v40
    %246 = vmatprep.subr.mxu0 %v38
    %247 = vmatpush1.msra.mxu0 %v37
    %248 = vmatprep.subr.mxu0 %v35
    %249 = vmatpush1.msra.mxu0 %v34
    %250 = vmatprep.subr.mxu0 %v32
    %251 = vmatpush1.msra.mxu0 %v31
    %252 = vmatprep.subr.mxu0 %v29
    %253 = vmatpush1.msra.mxu0 %v28
    %254 = vmatprep.subr.mxu0 %v26
    %255 = vmatpush1.msra.mxu0 %v25
    %256 = vmatprep.subr.mxu0 %v23
    %257 = vmatpush1.msra.mxu0 %v22
    %258 = vmatprep.subr.mxu0 %v20
    %259 = vmatpush1.msra.mxu0 %v19
    %260 = vmatprep.subr.mxu0 %v113
    %261 = vmatpush2.msra.mxu0 %v112
    %262 = vmatprep.subr.mxu0 %v110
    %263 = vmatpush2.msra.mxu0 %v109
    %264 = vmatprep.subr.mxu0 %v107
    %265 = vmatpush2.msra.mxu0 %v106
    %266 = vmatprep.subr.mxu0 %v104
    %267 = vmatpush2.msra.mxu0 %v103
    %268 = vmatprep.subr.mxu0 %v101
    %269 = vmatpush2.msra.mxu0 %v100
    %270 = vmatprep.subr.mxu0 %v98
    %271 = vmatpush2.msra.mxu0 %v97
    %272 = vmatprep.subr.mxu0 %v95
    %273 = vmatpush2.msra.mxu0 %v94
    %274 = vmatprep.subr.mxu0 %v92
    %275 = vmatpush2.msra.mxu0 %v91
    %276 = vmatprep.subr.mxu0 %v89
    %277 = vmatpush2.msra.mxu0 %v88
    %278 = vmatprep.subr.mxu0 %v86
    %279 = vmatpush2.msra.mxu0 %v85
    %280 = vmatprep.subr.mxu0 %v83
    %281 = vmatpush2.msra.mxu0 %v82
    %282 = vmatprep.subr.mxu0 %v80
    %283 = vmatpush2.msra.mxu0 %v79
    %284 = vmatprep.subr.mxu0 %v77
    %285 = vmatpush2.msra.mxu0 %v76
    %286 = vmatprep.subr.mxu0 %v74
    %287 = vmatpush2.msra.mxu0 %v73
    %288 = vmatprep.subr.mxu0 %v71
    %289 = vmatpush2.msra.mxu0 %v70
    %290 = vmatprep.subr.mxu0 %v68
    %291 = vmatpush2.msra.mxu0 %v67
    %292 = vmatprep.mubr.f32.mxu0 %v16
    %293 = vmatmul.mubr.f32.gmra.mxu0 %v15
    %v294 = vpop.f32.mrf.mxu0
    %v295 = vadd.f32 %v216, %v294
    %v296 = vpop.f32.mrf.mxu0
    %v297 = vadd.f32 %v220, %v296
    %298 = vdwg.mxu0
    %299 = vmatprep.subr.mxu0 %v161
    %300 = vmatpush1.msra.mxu0 %v160
    %301 = vmatprep.subr.mxu0 %v158
    %302 = vmatpush1.msra.mxu0 %v157
    %303 = vmatprep.subr.mxu0 %v155
    %304 = vmatpush1.msra.mxu0 %v154
    %305 = vmatprep.subr.mxu0 %v152
    %306 = vmatpush1.msra.mxu0 %v151
    %307 = vmatprep.subr.mxu0 %v149
    %308 = vmatpush1.msra.mxu0 %v148
    %309 = vmatprep.subr.mxu0 %v146
    %310 = vmatpush1.msra.mxu0 %v145
    %311 = vmatprep.subr.mxu0 %v143
    %312 = vmatpush1.msra.mxu0 %v142
    %313 = vmatprep.subr.mxu0 %v140
    %314 = vmatpush1.msra.mxu0 %v139
    %315 = vmatprep.subr.mxu0 %v137
    %316 = vmatpush1.msra.mxu0 %v136
    %317 = vmatprep.subr.mxu0 %v134
    %318 = vmatpush1.msra.mxu0 %v133
    %319 = vmatprep.subr.mxu0 %v131
    %320 = vmatpush1.msra.mxu0 %v130
    %321 = vmatprep.subr.mxu0 %v128
    %322 = vmatpush1.msra.mxu0 %v127
    %323 = vmatprep.subr.mxu0 %v125
    %324 = vmatpush1.msra.mxu0 %v124
    %325 = vmatprep.subr.mxu0 %v122
    %326 = vmatpush1.msra.mxu0 %v121
    %327 = vmatprep.subr.mxu0 %v119
    %328 = vmatpush1.msra.mxu0 %v118
    %329 = vmatprep.subr.mxu0 %v116
    %330 = vmatpush1.msra.mxu0 %v115
    %331 = vmatprep.subr.mxu0 %v209
    %332 = vmatpush2.msra.mxu0 %v208
    %333 = vmatprep.subr.mxu0 %v206
    %334 = vmatpush2.msra.mxu0 %v205
    %335 = vmatprep.subr.mxu0 %v203
    %336 = vmatpush2.msra.mxu0 %v202
    %337 = vmatprep.subr.mxu0 %v200
    %338 = vmatpush2.msra.mxu0 %v199
    %339 = vmatprep.subr.mxu0 %v197
    %340 = vmatpush2.msra.mxu0 %v196
    %341 = vmatprep.subr.mxu0 %v194
    %342 = vmatpush2.msra.mxu0 %v193
    %343 = vmatprep.subr.mxu0 %v191
    %344 = vmatpush2.msra.mxu0 %v190
    %345 = vmatprep.subr.mxu0 %v188
    %346 = vmatpush2.msra.mxu0 %v187
    %347 = vmatprep.subr.mxu0 %v185
    %348 = vmatpush2.msra.mxu0 %v184
    %349 = vmatprep.subr.mxu0 %v182
    %350 = vmatpush2.msra.mxu0 %v181
    %351 = vmatprep.subr.mxu0 %v179
    %352 = vmatpush2.msra.mxu0 %v178
    %353 = vmatprep.subr.mxu0 %v176
    %354 = vmatpush2.msra.mxu0 %v175
    %355 = vmatprep.subr.mxu0 %v173
    %356 = vmatpush2.msra.mxu0 %v172
    %357 = vmatprep.subr.mxu0 %v170
    %358 = vmatpush2.msra.mxu0 %v169
    %359 = vmatprep.subr.mxu0 %v167
    %360 = vmatpush2.msra.mxu0 %v166
    %361 = vmatprep.subr.mxu0 %v164
    %362 = vmatpush2.msra.mxu0 %v163
    %363 = vmatprep.mubr.f32.mxu0 %v18
    %364 = vmatmul.mubr.f32.gmra.mxu0 %v17
    %v365 = vpop.f32.mrf.mxu0
    %v366 = vadd.f32 %v295, %v365
    %v367 = vpop.f32.mrf.mxu0
    %v368 = vadd.f32 %v297, %v367
    %369 = vdwg.mxu0
    %370 = vmatprep.subr.mxu0 0.0
    %371 = vmatpush1.msra.mxu0 %v66
    %372 = vmatprep.subr.mxu0 0.0
    %373 = vmatpush1.msra.mxu0 %v63
    %374 = vmatprep.subr.mxu0 0.0
    %375 = vmatpush1.msra.mxu0 %v60
    %376 = vmatprep.subr.mxu0 0.0
    %377 = vmatpush1.msra.mxu0 %v57
    %378 = vmatprep.subr.mxu0 0.0
    %379 = vmatpush1.msra.mxu0 %v54
    %380 = vmatprep.subr.mxu0 0.0
    %381 = vmatpush1.msra.mxu0 %v51
    %382 = vmatprep.subr.mxu0 0.0
    %383 = vmatpush1.msra.mxu0 %v48
    %384 = vmatprep.subr.mxu0 0.0
    %385 = vmatpush1.msra.mxu0 %v45
    %386 = vmatprep.subr.mxu0 0.0
    %387 = vmatpush1.msra.mxu0 %v42
    %388 = vmatprep.subr.mxu0 0.0
    %389 = vmatpush1.msra.mxu0 %v39
    %390 = vmatprep.subr.mxu0 0.0
    %391 = vmatpush1.msra.mxu0 %v36
    %392 = vmatprep.subr.mxu0 0.0
    %393 = vmatpush1.msra.mxu0 %v33
    %394 = vmatprep.subr.mxu0 0.0
    %395 = vmatpush1.msra.mxu0 %v30
    %396 = vmatprep.subr.mxu0 0.0
    %397 = vmatpush1.msra.mxu0 %v27
    %398 = vmatprep.subr.mxu0 0.0
    %399 = vmatpush1.msra.mxu0 %v24
    %400 = vmatprep.subr.mxu0 0.0
    %401 = vmatpush1.msra.mxu0 %v21
    %402 = vmatprep.subr.mxu0 0.0
    %403 = vmatpush2.msra.mxu0 %v114
    %404 = vmatprep.subr.mxu0 0.0
    %405 = vmatpush2.msra.mxu0 %v111
    %406 = vmatprep.subr.mxu0 0.0
    %407 = vmatpush2.msra.mxu0 %v108
    %408 = vmatprep.subr.mxu0 0.0
    %409 = vmatpush2.msra.mxu0 %v105
    %410 = vmatprep.subr.mxu0 0.0
    %411 = vmatpush2.msra.mxu0 %v102
    %412 = vmatprep.subr.mxu0 0.0
    %413 = vmatpush2.msra.mxu0 %v99
    %414 = vmatprep.subr.mxu0 0.0
    %415 = vmatpush2.msra.mxu0 %v96
    %416 = vmatprep.subr.mxu0 0.0
    %417 = vmatpush2.msra.mxu0 %v93
    %418 = vmatprep.subr.mxu0 0.0
    %419 = vmatpush2.msra.mxu0 %v90
    %420 = vmatprep.subr.mxu0 0.0
    %421 = vmatpush2.msra.mxu0 %v87
    %422 = vmatprep.subr.mxu0 0.0
    %423 = vmatpush2.msra.mxu0 %v84
    %424 = vmatprep.subr.mxu0 0.0
    %425 = vmatpush2.msra.mxu0 %v81
    %426 = vmatprep.subr.mxu0 0.0
    %427 = vmatpush2.msra.mxu0 %v78
    %428 = vmatprep.subr.mxu0 0.0
    %429 = vmatpush2.msra.mxu0 %v75
    %430 = vmatprep.subr.mxu0 0.0
    %431 = vmatpush2.msra.mxu0 %v72
    %432 = vmatprep.subr.mxu0 0.0
    %433 = vmatpush2.msra.mxu0 %v69
    %434 = vmatprep.mubr.f32.mxu0 %v16
    %435 = vmatmul.mubr.f32.gmra.mxu0 %v15
    %v436 = vpop.f32.mrf.mxu0
    %v437 = vadd.f32 %v224, %v436
    %v438 = vpop.f32.mrf.mxu0
    %439 = vdwg.mxu0
    %440 = vmatprep.subr.mxu0 0.0
    %441 = vmatpush1.msra.mxu0 %v162
    %442 = vmatprep.subr.mxu0 0.0
    %443 = vmatpush1.msra.mxu0 %v159
    %444 = vmatprep.subr.mxu0 0.0
    %445 = vmatpush1.msra.mxu0 %v156
    %446 = vmatprep.subr.mxu0 0.0
    %447 = vmatpush1.msra.mxu0 %v153
    %448 = vmatprep.subr.mxu0 0.0
    %449 = vmatpush1.msra.mxu0 %v150
    %450 = vmatprep.subr.mxu0 0.0
    %451 = vmatpush1.msra.mxu0 %v147
    %452 = vmatprep.subr.mxu0 0.0
    %453 = vmatpush1.msra.mxu0 %v144
    %454 = vmatprep.subr.mxu0 0.0
    %455 = vmatpush1.msra.mxu0 %v141
    %456 = vmatprep.subr.mxu0 0.0
    %457 = vmatpush1.msra.mxu0 %v138
    %458 = vmatprep.subr.mxu0 0.0
    %459 = vmatpush1.msra.mxu0 %v135
    %460 = vmatprep.subr.mxu0 0.0
    %461 = vmatpush1.msra.mxu0 %v132
    %462 = vmatprep.subr.mxu0 0.0
    %463 = vmatpush1.msra.mxu0 %v129
    %464 = vmatprep.subr.mxu0 0.0
    %465 = vmatpush1.msra.mxu0 %v126
    %466 = vmatprep.subr.mxu0 0.0
    %467 = vmatpush1.msra.mxu0 %v123
    %468 = vmatprep.subr.mxu0 0.0
    %469 = vmatpush1.msra.mxu0 %v120
    %470 = vmatprep.subr.mxu0 0.0
    %471 = vmatpush1.msra.mxu0 %v117
    %472 = vmatprep.subr.mxu0 0.0
    %473 = vmatpush2.msra.mxu0 %v210
    %474 = vmatprep.subr.mxu0 0.0
    %475 = vmatpush2.msra.mxu0 %v207
    %476 = vmatprep.subr.mxu0 0.0
    %477 = vmatpush2.msra.mxu0 %v204
    %478 = vmatprep.subr.mxu0 0.0
    %479 = vmatpush2.msra.mxu0 %v201
    %480 = vmatprep.subr.mxu0 0.0
    %481 = vmatpush2.msra.mxu0 %v198
    %482 = vmatprep.subr.mxu0 0.0
    %483 = vmatpush2.msra.mxu0 %v195
    %484 = vmatprep.subr.mxu0 0.0
    %485 = vmatpush2.msra.mxu0 %v192
    %486 = vmatprep.subr.mxu0 0.0
    %487 = vmatpush2.msra.mxu0 %v189
    %488 = vmatprep.subr.mxu0 0.0
    %489 = vmatpush2.msra.mxu0 %v186
    %490 = vmatprep.subr.mxu0 0.0
    %491 = vmatpush2.msra.mxu0 %v183
    %492 = vmatprep.subr.mxu0 0.0
    %493 = vmatpush2.msra.mxu0 %v180
    %494 = vmatprep.subr.mxu0 0.0
    %495 = vmatpush2.msra.mxu0 %v177
    %496 = vmatprep.subr.mxu0 0.0
    %497 = vmatpush2.msra.mxu0 %v174
    %498 = vmatprep.subr.mxu0 0.0
    %499 = vmatpush2.msra.mxu0 %v171
    %500 = vmatprep.subr.mxu0 0.0
    %501 = vmatpush2.msra.mxu0 %v168
    %502 = vmatprep.subr.mxu0 0.0
    %503 = vmatpush2.msra.mxu0 %v165
    %504 = vmatprep.mubr.f32.mxu0 %v18
    %505 = vmatmul.mubr.f32.gmra.mxu0 %v17
    %v506 = vpop.f32.mrf.mxu0
    %v507 = vadd.f32 %v437, %v506
    %v508 = vpop.f32.mrf.mxu0
    %509 = vdwg.mxu0
    %vm510 = vcmask 523264
    %v511 = vsel %vm510, %v507, -inf
    %v512 = vmax.f32 %v366, %v368
    %v513 = vmax.f32 %v512, %v511
    %514 = vmax.xlane.f32.xlu0 %v513
    %v515 = vpop.xlane.xlu0 %514
    %v516 = vsub.f32 %v366, %v515
    %v517 = vsub.f32 %v368, %v515
    %v518 = vsub.f32 %v507, %v515
    %v519 = vmul.f32 %v516, 1.442695
    %v520 = vpow.pop %v519
    %v521 = vmul.f32 %v517, 1.442695
    %v522 = vpow.pop %v521
    %v523 = vmul.f32 %v518, 1.442695
    %v524 = vpow.pop %v523
    %v525 = vadd.f32 %v520, %v522
    %v526 = vsel %vm510, %v524, 0.0
    %v527 = vadd.f32 %v525, %v526
    %528 = vadd.xlane.f32.xlu0 %v527
    %v529 = vpop.xlane.xlu0 %528
    %v530 = vlog2.pop %v529
    %v531 = vmul.f32 %v530, 0.6931472
    %v532 = vsub.f32 %v516, %v531
    %v533 = vsub.f32 %v517, %v531
    %v534 = vsub.f32 %v518, %v531
    %535 = vst [vmem:[#allocation2] sm:$0xff] %v532
    %536 = vst [vmem:[#allocation2 + $0x8] sm:$0xff] %v533
    %537 = vst.msk [vmem:[#allocation2 + $0x10] sm:$0xff] %vm510, %v534
    // Predicated region
    $region14: #{tpu_custom_call.1} parent=1 // pred_check
      _
    $region15: #{tpu_custom_call.1} parent=1 // pred_check_branch
      %539 = sbr.rel (0) target = $region17
    $region16: #{tpu_custom_call.1} parent=1 // pred_region
      %s541 = ssub.s32 384, 384
      %542 = vsyncadd [#allocation3], %s541
      %s544 = sshll.u32 [#allocation2], 4
      %s545 = int_to_ptr.vmem [resolvable:$true] %s544
      %547 = dma.vmem_to_hbm [thread:$0]  %s545, 384, %s3, [#allocation3]
    $region17: #{tpu_custom_call.1} parent=1 // pred_fallthru
      _
    // Predicated region
    $region18: #{tpu_custom_call.1} parent=1 // pred_check
      _
    $region19: #{tpu_custom_call.1} parent=1 // pred_check_branch
      %549 = sbr.rel (0) target = $region21
    $region20: #{tpu_custom_call.1} parent=1 // pred_region
      %550 = dma.done [#allocation3], 384
    $region21: #{tpu_custom_call.1} parent=1 // pred_fallthru
      _
    %551 = vsyncpa [#allocation3], 1

</llo_original>
